<compile_context>
chip_gen: v7x
topology: tpu7x:2x2x1
jax: 0.10.0
libtpu: 0.0.40
codegen_flags: <defaults>
</compile_context>

<pallas_src>
import functools

import jax
import jax.numpy as jnp
from jax.experimental import pallas as pl
from jax.experimental.pallas import tpu as pltpu


def _round_up(x, m):
    return ((x + m - 1) // m) * m


# --------------------------------------------------------------------------------------
# Kernel body
# --------------------------------------------------------------------------------------
def _mlp_kernel(x_ref, w1_ref, b1_ref, w2_ref, b2_ref, o_ref, *scratch,
                activation, gelu_approximate, n_hidden_tiles):
    # First linear on this hidden slice: (tm, dim_p) @ (dim_p, tk) -> (tm, tk), f32 acc.
    h = jnp.dot(x_ref[...], w1_ref[...], preferred_element_type=jnp.float32)
    h = h + b1_ref[...]                           # (1, tk) f32 bias broadcast over rows
    if activation == "relu":
        h = jnp.maximum(h, 0.0)
    else:  # 'gelu' -- exact erf form by default (matches torch F.gelu); tanh behind a flag
        h = jax.nn.gelu(h, approximate=gelu_approximate)

    # Second linear on this hidden slice: (tm, tk) @ (tk, dim_p) -> (tm, dim_p), f32.
    part = jnp.dot(h.astype(w2_ref.dtype), w2_ref[...],
                   preferred_element_type=jnp.float32)

    if n_hidden_tiles == 1:
        # Whole hidden dim in one slice: write out directly, no accumulator round-trip.
        o_ref[...] = (part + b2_ref[...]).astype(o_ref.dtype)
    else:
        acc_ref, = scratch
        k = pl.program_id(1)

        @pl.when(k == 0)
        def _():
            acc_ref[...] = part                   # first slice: write, don't zero-then-add

        @pl.when(k > 0)
        def _():
            acc_ref[...] += part

        @pl.when(k == n_hidden_tiles - 1)
        def _():
            o_ref[...] = (acc_ref[...] + b2_ref[...]).astype(o_ref.dtype)


# --------------------------------------------------------------------------------------
# Hardware-aware planning
# --------------------------------------------------------------------------------------
@functools.lru_cache(maxsize=None)
def _hw_defaults():
    """Probe the TPU generation once; fall back to conservative defaults if unknown."""
    vmem_cap = None
    try:
        vmem_cap = int(pltpu.get_tpu_info().vmem_capacity_bytes)
    except Exception:
        pass
    kind = ""
    try:
        kind = jax.devices()[0].device_kind.lower()
    except Exception:
        pass
    is_v7 = ("v7" in kind) or ("7x" in kind)
    is_v5 = "v5" in kind
    if vmem_cap is None:
        vmem_cap = (64 if is_v7 else 128) * 1024 * 1024

    num_cores = 2 if is_v7 else 1                  # v7x: 2 TensorCores share grid axis 0
    feat_align = 128 if is_v5 else 256             # MXU: 4x128^2 (v5e) vs 2x256^2 (v6e/v7x)
    if vmem_cap <= 64 * 1024 * 1024:               # v7x-class: 64 MiB physical
        vmem_limit = 48 * 1024 * 1024
        tm_default, tk_default = 512, 512
    else:                                          # v5e/v6e: 128 MiB physical
        vmem_limit = 100 * 1024 * 1024
        tm_default = 512 if is_v5 else 1024
        tk_default = 512
    return dict(vmem_limit=vmem_limit, tm=tm_default, tk=tk_default,
                feat_align=feat_align, num_cores=num_cores)


def _vmem_footprint(tm, tk, dim_p, in_bytes, out_bytes):
    """Conservative VMEM bytes for one grid step (double-buffered blocks + f32 acc)."""
    total = 2 * tm * dim_p * in_bytes              # x row tile
    total += 2 * dim_p * tk * in_bytes             # W1 hidden slice
    total += 2 * tk * 4                            # b1 slice (f32)
    total += 2 * tk * dim_p * in_bytes             # W2 hidden slice
    total += 2 * dim_p * 4                         # b2
    total += 2 * tm * dim_p * out_bytes            # output row tile
    total += tm * dim_p * 4                        # f32 accumulator scratch
    return total


# --------------------------------------------------------------------------------------
# Parameter preparation (hoisted out of the per-call hot path)
# --------------------------------------------------------------------------------------
def prepare_mlp_params(w1, b1, w2, b2, *, activation="relu", gelu_approximate=False,
                       compute_dtype=jnp.bfloat16, out_dtype=None,
                       tm=None, tk=None, vmem_limit_bytes=None):
    """Pad + cast the weights once and pick a tiling plan.

    w1: (dim, hidden)  == torch hidden_layer.weight.T
    b1: (hidden,)      == torch hidden_layer.bias
    w2: (hidden, dim)  == torch out_layer.weight.T
    b2: (dim,)         == torch out_layer.bias
    """
    assert activation in ("relu", "gelu")
    dim, hidden = w1.shape
    assert w2.shape == (hidden, dim)
    assert b1.size == hidden and b2.size == dim

    hw = _hw_defaults()
    feat_align = hw["feat_align"]
    vmem_limit = int(vmem_limit_bytes or hw["vmem_limit"])
    tm = int(tm or hw["tm"])
    tk = int(tk or hw["tk"])

    dim_p = _round_up(dim, feat_align)             # lane-dense feature / output axis
    tk = max(feat_align, _round_up(tk, feat_align))
    tk = min(tk, _round_up(hidden, feat_align))
    tm = max(16, _round_up(tm, 16))

    in_bytes = jnp.dtype(compute_dtype).itemsize
    out_bytes = jnp.dtype(out_dtype).itemsize if out_dtype is not None else 4
    budget = int(vmem_limit * 0.9)                 # headroom for Mosaic internals
    # Shrink tk first (same total weight traffic, smaller slices), then tm.
    while _vmem_footprint(tm, tk, dim_p, in_bytes, out_bytes) > budget and tk > feat_align:
        tk = max(feat_align, tk // 2)
    while _vmem_footprint(tm, tk, dim_p, in_bytes, out_bytes) > budget and tm > 128:
        tm = max(128, tm // 2)

    hidden_p = _round_up(hidden, tk)               # zero padding is exact for this MLP

    def pad2(a, r, c):
        if a.shape != (r, c):
            a = jnp.pad(a, ((0, r - a.shape[0]), (0, c - a.shape[1])))
        return a

    w1_p = pad2(jnp.asarray(w1), dim_p, hidden_p).astype(compute_dtype)
    w2_p = pad2(jnp.asarray(w2), hidden_p, dim_p).astype(compute_dtype)
    b1_p = pad2(jnp.asarray(b1, jnp.float32).reshape(1, hidden), 1, hidden_p)
    b2_p = pad2(jnp.asarray(b2, jnp.float32).reshape(1, dim), 1, dim_p)

    return dict(
        w1_p=w1_p, b1_p=b1_p, w2_p=w2_p, b2_p=b2_p,
        dim=dim, hidden=hidden, dim_p=dim_p, hidden_p=hidden_p,
        tm=tm, tk=tk,
        activation=activation, gelu_approximate=gelu_approximate,
        compute_dtype=compute_dtype, out_dtype=out_dtype,
        vmem_limit=vmem_limit, num_cores=hw["num_cores"],
    )


# --------------------------------------------------------------------------------------
# Forward pass
# --------------------------------------------------------------------------------------
def mlp_apply(x, params):
    """x: (..., dim) -> (..., dim) using pre-prepared (padded, cast) parameters."""
    p = params
    dim, dim_p, hidden_p, tk = p["dim"], p["dim_p"], p["hidden_p"], p["tk"]
    assert x.shape[-1] == dim
    orig_shape = x.shape
    out_dtype = p["out_dtype"] if p["out_dtype"] is not None else x.dtype

    x2d = x.reshape(-1, dim)
    M = x2d.shape[0]

    # Row tile: don't over-pad tiny inputs; on multi-core chips keep grid_m >= 2
    # whenever M permits so both TensorCores get work ("parallel" shards axis 0).
    tm = min(p["tm"], _round_up(max(M, 1), 16))
    if p["num_cores"] >= 2:
        tm = min(tm, max(16, _round_up((M + 1) // 2, 16)))
    M_p = _round_up(M, tm)
    grid_m = M_p // tm
    n_k = hidden_p // tk

    x_p = x2d
    if (M_p, dim_p) != x_p.shape:
        x_p = jnp.pad(x_p, ((0, M_p - M), (0, dim_p - dim)))
    x_p = x_p.astype(p["compute_dtype"])

    kernel = functools.partial(
        _mlp_kernel,
        activation=p["activation"],
        gelu_approximate=p["gelu_approximate"],
        n_hidden_tiles=n_k,
    )

    out = pl.pallas_call(
        kernel,
        out_shape=jax.ShapeDtypeStruct((M_p, dim_p), out_dtype),
        grid_spec=pltpu.PrefetchScalarGridSpec(
            num_scalar_prefetch=0,
            grid=(grid_m, n_k),                    # rows parallel, hidden reduction last
            in_specs=[
                pl.BlockSpec((tm, dim_p), lambda i, k: (i, 0)),   # x row tile
                pl.BlockSpec((dim_p, tk), lambda i, k: (0, k)),   # W1 hidden slice
                pl.BlockSpec((1, tk),     lambda i, k: (0, k)),   # b1 hidden slice
                pl.BlockSpec((tk, dim_p), lambda i, k: (k, 0)),   # W2 hidden slice
                pl.BlockSpec((1, dim_p),  lambda i, k: (0, 0)),   # b2 (constant)
            ],
            out_specs=pl.BlockSpec((tm, dim_p), lambda i, k: (i, 0)),
            scratch_shapes=([pltpu.VMEM((tm, dim_p), jnp.float32)] if n_k > 1 else []),
        ),
        compiler_params=pltpu.CompilerParams(
            dimension_semantics=("parallel", "arbitrary"),
            vmem_limit_bytes=p["vmem_limit"],
        ),
    )(x_p, p["w1_p"], p["b1_p"], p["w2_p"], p["b2_p"])

    return out[:M, :dim].reshape(orig_shape)


def mlp_pallas(x, w1, b1, w2, b2, *, activation="relu", gelu_approximate=False,
               compute_dtype=jnp.bfloat16, out_dtype=None,
               tm=None, tk=None, vmem_limit_bytes=None):
    """Convenience wrapper: prepares parameters and applies in one call.
    For repeated forward passes, call prepare_mlp_params() once and reuse mlp_apply()."""
    params = prepare_mlp_params(
        w1, b1, w2, b2, activation=activation, gelu_approximate=gelu_approximate,
        compute_dtype=compute_dtype, out_dtype=out_dtype,
        tm=tm, tk=tk, vmem_limit_bytes=vmem_limit_bytes)
    return mlp_apply(x, params)


def init_mlp_params(key, dim, dtype=jnp.float32):
    """Deterministic init matching the PyTorch module's shapes.
    nn.Linear(dim, hidden).weight has shape (hidden, dim); we store the transpose."""
    hidden = dim * 4
    k1, k2, k3, k4 = jax.random.split(key, 4)
    bound1 = 1.0 / (dim ** 0.5)
    bound2 = 1.0 / (hidden ** 0.5)
    w1 = jax.random.uniform(k1, (dim, hidden), dtype, -bound1, bound1)   # hidden_layer.weight.T
    b1 = jax.random.uniform(k2, (hidden,), dtype, -bound1, bound1)       # hidden_layer.bias
    w2 = jax.random.uniform(k3, (hidden, dim), dtype, -bound2, bound2)   # out_layer.weight.T
    b2 = jax.random.uniform(k4, (dim,), dtype, -bound2, bound2)          # out_layer.bias
    return w1, b1, w2, b2


if __name__ == "__main__":
    key = jax.random.PRNGKey(0)
    kx, kp = jax.random.split(key)

    batch, seq, dim = 2, 8, 32            # hidden = 4*dim = 128
    x = jax.random.normal(kx, (batch, seq, dim), jnp.float32)
    w1, b1, w2, b2 = init_mlp_params(kp, dim)
    x2d = x.reshape(-1, dim)

    # 1) Default bf16-compute ReLU path with parameters prepared once (hoisted pad/cast).
    params = prepare_mlp_params(w1, b1, w2, b2, activation="relu")
    out = jax.block_until_ready(mlp_apply(x, params))
    ref = (jnp.maximum(x2d @ w1 + b1, 0.0) @ w2 + b2).reshape(batch, seq, dim)
    assert out.shape == (batch, seq, dim)
    # bf16 inputs/weights (f32 accumulation) -> relaxed tolerance vs. the f32 reference.
    assert jnp.allclose(out, ref, atol=2e-2, rtol=2e-2), float(jnp.max(jnp.abs(out - ref)))

    # 2) f32-compute exact-GELU path (accuracy escape hatch matching torch F.gelu).
    out_g = jax.block_until_ready(
        mlp_pallas(x, w1, b1, w2, b2, activation="gelu", compute_dtype=jnp.float32))
    ref_g = (jax.nn.gelu(x2d @ w1 + b1, approximate=False) @ w2 + b2).reshape(batch, seq, dim)
    assert jnp.allclose(out_g, ref_g, atol=2e-2, rtol=2e-2), float(jnp.max(jnp.abs(out_g - ref_g)))

    print("KERNEL_OK")
</pallas_src>

<mosaic_0001>
module attributes {stable_mosaic.version = 11 : i64} {
  func.func @_mlp_kernel(%arg0: i32, %arg1: i32, %arg2: memref<16x256xbf16, #tpu.memory_space<vmem>>, %arg3: memref<256x256xbf16, #tpu.memory_space<vmem>>, %arg4: memref<1x256xf32, #tpu.memory_space<vmem>>, %arg5: memref<256x256xbf16, #tpu.memory_space<vmem>>, %arg6: memref<1x256xf32, #tpu.memory_space<vmem>>, %arg7: memref<16x256xf32, #tpu.memory_space<vmem>>) attributes {dimension_semantics = [#tpu.dimension_semantics<parallel>, #tpu.dimension_semantics<arbitrary>], iteration_bounds = array<i64: 1, 1>, scalar_prefetch = 0 : i64, scratch_operands = 0 : i64, tpu.core_type = #tpu.core_type<tc>, window_params = [{transform_indices = @transform_0, window_bounds = array<i64: 16, 256>}, {transform_indices = @transform_1, window_bounds = array<i64: 256, 256>}, {transform_indices = @transform_2, window_bounds = array<i64: 1, 256>}, {transform_indices = @transform_3, window_bounds = array<i64: 256, 256>}, {pipeline_mode = #tpu.pipeline_mode<synchronous>, transform_indices = @transform_4, window_bounds = array<i64: 1, 256>}, {transform_indices = @transform_5, window_bounds = array<i64: 16, 256>}]} {
    %c0 = arith.constant 0 : index
    %c0_0 = arith.constant 0 : index
    %0 = vector.load %arg2[%c0, %c0_0] : memref<16x256xbf16, #tpu.memory_space<vmem>>, vector<16x256xbf16>
    %c0_1 = arith.constant 0 : index
    %c0_2 = arith.constant 0 : index
    %1 = vector.load %arg3[%c0_1, %c0_2] : memref<256x256xbf16, #tpu.memory_space<vmem>>, vector<256x256xbf16>
    %cst = arith.constant dense<0.000000e+00> : vector<16x256xf32>
    %2 = tpu.matmul %0, %1, %cst {dimension_numbers = #tpu.dot_dimension_numbers<[1], [0], [0], [1], [0, 0, 1, 1], [], []>} : vector<16x256xbf16>, vector<256x256xbf16>, vector<16x256xf32> -> vector<16x256xf32>
    %c0_3 = arith.constant 0 : index
    %c0_4 = arith.constant 0 : index
    %3 = vector.load %arg4[%c0_3, %c0_4] : memref<1x256xf32, #tpu.memory_space<vmem>>, vector<1x256xf32>
    %4 = vector.broadcast %3 : vector<1x256xf32> to vector<16x256xf32>
    %5 = arith.addf %2, %4 : vector<16x256xf32>
    %cst_5 = arith.constant 0.000000e+00 : f32
    %6 = vector.broadcast %cst_5 : f32 to vector<16x256xf32>
    %7 = arith.maximumf %5, %6 : vector<16x256xf32>
    %8 = arith.truncf %7 : vector<16x256xf32> to vector<16x256xbf16>
    %c0_6 = arith.constant 0 : index
    %c0_7 = arith.constant 0 : index
    %9 = vector.load %arg5[%c0_6, %c0_7] : memref<256x256xbf16, #tpu.memory_space<vmem>>, vector<256x256xbf16>
    %cst_8 = arith.constant dense<0.000000e+00> : vector<16x256xf32>
    %10 = tpu.matmul %8, %9, %cst_8 {dimension_numbers = #tpu.dot_dimension_numbers<[1], [0], [0], [1], [0, 0, 1, 1], [], []>} : vector<16x256xbf16>, vector<256x256xbf16>, vector<16x256xf32> -> vector<16x256xf32>
    %c0_9 = arith.constant 0 : index
    %c0_10 = arith.constant 0 : index
    %11 = vector.load %arg6[%c0_9, %c0_10] : memref<1x256xf32, #tpu.memory_space<vmem>>, vector<1x256xf32>
    %12 = vector.broadcast %11 : vector<1x256xf32> to vector<16x256xf32>
    %13 = arith.addf %10, %12 : vector<16x256xf32>
    %c0_11 = arith.constant 0 : index
    %c0_12 = arith.constant 0 : index
    %14 = vector.load %arg7[%c0_11, %c0_12] : memref<16x256xf32, #tpu.memory_space<vmem>>, vector<16x256xf32>
    tpu.vector_store %arg7[%c0_11, %c0_12], %13 {strides = array<i32>} : memref<16x256xf32, #tpu.memory_space<vmem>>, vector<16x256xf32>,
    return
  }
  func.func @transform_0(%arg0: i32, %arg1: i32) -> (i32, i32) {
    %c0_i32 = arith.constant 0 : i32
    %c0_i32_0 = arith.constant 0 : i32
    return %arg0, %c0_i32 : i32, i32
  }
  func.func @transform_1(%arg0: i32, %arg1: i32) -> (i32, i32) {
    %c0_i32 = arith.constant 0 : i32
    %c0_i32_0 = arith.constant 0 : i32
    return %c0_i32, %arg1 : i32, i32
  }
  func.func @transform_2(%arg0: i32, %arg1: i32) -> (i32, i32) {
    %c0_i32 = arith.constant 0 : i32
    %c0_i32_0 = arith.constant 0 : i32
    return %c0_i32, %arg1 : i32, i32
  }
  func.func @transform_3(%arg0: i32, %arg1: i32) -> (i32, i32) {
    %c0_i32 = arith.constant 0 : i32
    %c0_i32_0 = arith.constant 0 : i32
    return %arg1, %c0_i32 : i32, i32
  }
  func.func @transform_4(%arg0: i32, %arg1: i32) -> (i32, i32) {
    %c0_i32 = arith.constant 0 : i32
    %c0_i32_0 = arith.constant 0 : i32
    %c0_i32_1 = arith.constant 0 : i32
    return %c0_i32, %c0_i32_0 : i32, i32
  }
  func.func @transform_5(%arg0: i32, %arg1: i32) -> (i32, i32) {
    %c0_i32 = arith.constant 0 : i32
    %c0_i32_0 = arith.constant 0 : i32
    return %arg0, %c0_i32 : i32, i32
  }
}

</mosaic_0001>

<llo_original>
// kernel: tpu_custom_call.1
$region0: #{tpu_custom_call.1}
  #allocation0 [shape = 'u32[]', space=smem, size = 0x4, offset = 0x4, fixed_abs, tag = 'smem constant byte address 0x4 - core index']
  #allocation1 [shape = 'u32[144,128]{1,0:T(1,128)}', space=vmem, size = 0x12000, scoped, tag = 'internal scratch']
  %s0 = inlined_call_operand.hbm [shape: bf16[16,256], index: 0, kind: input, shape index: {}]
  %s1 = inlined_call_operand.hbm [shape: bf16[256,256], index: 1, kind: input, shape index: {}]
  %s2 = inlined_call_operand.hbm [shape: f32[1,256], index: 2, kind: input, shape index: {}]
  %s3 = inlined_call_operand.hbm [shape: bf16[256,256], index: 3, kind: input, shape index: {}]
  %s4 = inlined_call_operand.hbm [shape: f32[1,256], index: 4, kind: input, shape index: {}]
  %s5 = inlined_call_operand.hbm [shape: f32[16,256], index: 5, kind: output, shape index: {}]
  %s6 = sld [smem:[#allocation0]]
  $region50: #{tpu_custom_call.1} parent=0
    _
  %s8 = ssub.s32 1, %s6
  %s9 = scalar_select 0, %s8, %s6
  $region1: #{tpu_custom_call.1} parent=0
    #allocation2 [shape = 'u8[8192]{0}', space=vmem, size = 0x2000, scoped, tag = 'input window, operand 0, single buffered']
    #allocation3 [shape = 's32[1]{0}', space=sflag, size = 0x4, scoped, tag = 'scoped memory for tpu_custom_call.1']
    #allocation4 [shape = 's32[1]{0}', space=sflag, size = 0x4, scoped, tag = 'scoped memory for tpu_custom_call.1']
    #allocation5 [shape = 'u8[131072]{0}', space=vmem, size = 0x20000, scoped, tag = 'input window, operand 1, single buffered']
    #allocation6 [shape = 's32[1]{0}', space=sflag, size = 0x4, scoped, tag = 'scoped memory for tpu_custom_call.1']
    #allocation7 [shape = 'u8[1024]{0}', space=vmem, size = 0x400, scoped, tag = 'input window, operand 2, single buffered']
    #allocation8 [shape = 'u8[131072]{0}', space=vmem, size = 0x20000, scoped, tag = 'input window, operand 3, single buffered']
    #allocation9 [shape = 's32[1]{0}', space=sflag, size = 0x4, scoped, tag = 'scoped memory for tpu_custom_call.1']
    #allocation10 [shape = 'u8[1024]{0}', space=vmem, size = 0x400, scoped, tag = 'input window, operand 4, single buffered']
    #allocation11 [shape = 'u8[16384]{0}', space=vmem, size = 0x4000, scoped, tag = 'output window, operand 0, single buffered']
    %10 = vsyncpa [#allocation3], 0
    %11 = vsyncpa [#allocation6], 0
    %12 = vsyncpa [#allocation9], 0
    %13 = vsyncpa [#allocation4], 0
    // Predicated region
    $region2: #{tpu_custom_call.1} parent=1 // pred_check
      _
    $region3: #{tpu_custom_call.1} parent=1 // pred_check_branch
      %15 = sbr.rel (0) target = $region5
    $region4: #{tpu_custom_call.1} parent=1 // pred_region
      %s17 = ssub.s32 256, 256
      %18 = vsyncadd [#allocation3], %s17
      %s19 = sshll.u32 [#allocation2], 4
      %s20 = int_to_ptr.vmem [resolvable:$true] %s19
      %25 = dma.hbm_to_vmem [thread:$0]  %s0, 256, %s20, [#allocation3], 128, 128, 8
    $region5: #{tpu_custom_call.1} parent=1 // pred_fallthru
      _
    // Predicated region
    $region6: #{tpu_custom_call.1} parent=1 // pred_check
      _
    $region7: #{tpu_custom_call.1} parent=1 // pred_check_branch
      %27 = sbr.rel (0) target = $region9
    $region8: #{tpu_custom_call.1} parent=1 // pred_region
      %s29 = ssub.s32 4096, 4096
      %30 = vsyncadd [#allocation6], %s29
      %s31 = sshll.u32 [#allocation5], 4
      %s32 = int_to_ptr.vmem [resolvable:$true] %s31
      %37 = dma.hbm_to_vmem [thread:$0]  %s1, 4096, %s32, [#allocation6], 128, 128, 8
    $region9: #{tpu_custom_call.1} parent=1 // pred_fallthru
      _
    // Predicated region
    $region10: #{tpu_custom_call.1} parent=1 // pred_check
      _
    $region11: #{tpu_custom_call.1} parent=1 // pred_check_branch
      %39 = sbr.rel (0) target = $region13
    $region12: #{tpu_custom_call.1} parent=1 // pred_region
      %s41 = ssub.s32 32, 32
      %42 = vsyncadd [#allocation6], %s41
      %s44 = sshll.u32 [#allocation7], 4
      %s45 = int_to_ptr.vmem [resolvable:$true] %s44
      %47 = dma.hbm_to_vmem [thread:$0]  %s2, 32, %s45, [#allocation6]
    $region13: #{tpu_custom_call.1} parent=1 // pred_fallthru
      _
    // Predicated region
    $region14: #{tpu_custom_call.1} parent=1 // pred_check
      _
    $region15: #{tpu_custom_call.1} parent=1 // pred_check_branch
      %49 = sbr.rel (0) target = $region17
    $region16: #{tpu_custom_call.1} parent=1 // pred_region
      %s51 = ssub.s32 4096, 4096
      %52 = vsyncadd [#allocation9], %s51
      %s53 = sshll.u32 [#allocation8], 4
      %s54 = int_to_ptr.vmem [resolvable:$true] %s53
      %59 = dma.hbm_to_vmem [thread:$0]  %s3, 4096, %s54, [#allocation9], 128, 128, 8
    $region17: #{tpu_custom_call.1} parent=1 // pred_fallthru
      _
    // Predicated region
    $region18: #{tpu_custom_call.1} parent=1 // pred_check
      _
    $region19: #{tpu_custom_call.1} parent=1 // pred_check_branch
      %61 = sbr.rel (0) target = $region21
    $region20: #{tpu_custom_call.1} parent=1 // pred_region
      %s63 = ssub.s32 32, 32
      %64 = vsyncadd [#allocation9], %s63
      %s66 = sshll.u32 [#allocation10], 4
      %s67 = int_to_ptr.vmem [resolvable:$true] %s66
      %69 = dma.hbm_to_vmem [thread:$0]  %s4, 32, %s67, [#allocation9]
    $region21: #{tpu_custom_call.1} parent=1 // pred_fallthru
      _
    // Predicated region
    $region22: #{tpu_custom_call.1} parent=1 // pred_check
      _
    $region23: #{tpu_custom_call.1} parent=1 // pred_check_branch
      %71 = sbr.rel (0) target = $region25
    $region24: #{tpu_custom_call.1} parent=1 // pred_region
      %72 = dma.done [#allocation3], 256
    $region25: #{tpu_custom_call.1} parent=1 // pred_fallthru
      _
    // Predicated region
    $region26: #{tpu_custom_call.1} parent=1 // pred_check
      _
    $region27: #{tpu_custom_call.1} parent=1 // pred_check_branch
      %74 = sbr.rel (0) target = $region29
    $region28: #{tpu_custom_call.1} parent=1 // pred_region
      %75 = dma.done [#allocation6], 4096
    $region29: #{tpu_custom_call.1} parent=1 // pred_fallthru
      _
    // Predicated region
    $region30: #{tpu_custom_call.1} parent=1 // pred_check
      _
    $region31: #{tpu_custom_call.1} parent=1 // pred_check_branch
      %77 = sbr.rel (0) target = $region33
    $region32: #{tpu_custom_call.1} parent=1 // pred_region
      %78 = dma.done [#allocation6], 32
    $region33: #{tpu_custom_call.1} parent=1 // pred_fallthru
      _
    // Predicated region
    $region34: #{tpu_custom_call.1} parent=1 // pred_check
      _
    $region35: #{tpu_custom_call.1} parent=1 // pred_check_branch
      %80 = sbr.rel (0) target = $region37
    $region36: #{tpu_custom_call.1} parent=1 // pred_region
      %81 = dma.done [#allocation9], 4096
    $region37: #{tpu_custom_call.1} parent=1 // pred_fallthru
      _
    // Predicated region
    $region38: #{tpu_custom_call.1} parent=1 // pred_check
      _
    $region39: #{tpu_custom_call.1} parent=1 // pred_check_branch
      %83 = sbr.rel (0) target = $region41
    $region40: #{tpu_custom_call.1} parent=1 // pred_region
      %84 = dma.done [#allocation9], 32
    $region41: #{tpu_custom_call.1} parent=1 // pred_fallthru
      _
    %v85 = vld [vmem:[#allocation2] sm:$0xff]
    %v86 = vld [vmem:[#allocation2 + $0x8] sm:$0xff]
    %v87 = vld [vmem:[#allocation5] sm:$0xff]
    %v88 = vld [vmem:[#allocation5 + $0x8] sm:$0xff]
    %v89 = vld [vmem:[#allocation5 + $0x10] sm:$0xff]
    %v90 = vld [vmem:[#allocation5 + $0x18] sm:$0xff]
    %v91 = vld [vmem:[#allocation5 + $0x20] sm:$0xff]
    %v92 = vld [vmem:[#allocation5 + $0x28] sm:$0xff]
    %v93 = vld [vmem:[#allocation5 + $0x30] sm:$0xff]
    %v94 = vld [vmem:[#allocation5 + $0x38] sm:$0xff]
    %v95 = vld [vmem:[#allocation5 + $0x40] sm:$0xff]
    %v96 = vld [vmem:[#allocation5 + $0x48] sm:$0xff]
    %v97 = vld [vmem:[#allocation5 + $0x50] sm:$0xff]
    %v98 = vld [vmem:[#allocation5 + $0x58] sm:$0xff]
    %v99 = vld [vmem:[#allocation5 + $0x60] sm:$0xff]
    %v100 = vld [vmem:[#allocation5 + $0x68] sm:$0xff]
    %v101 = vld [vmem:[#allocation5 + $0x70] sm:$0xff]
    %v102 = vld [vmem:[#allocation5 + $0x78] sm:$0xff]
    %v103 = vld [vmem:[#allocation5 + $0x80] sm:$0xff]
    %v104 = vld [vmem:[#allocation5 + $0x88] sm:$0xff]
    %v105 = vld [vmem:[#allocation5 + $0x90] sm:$0xff]
    %v106 = vld [vmem:[#allocation5 + $0x98] sm:$0xff]
    %v107 = vld [vmem:[#allocation5 + $0xa0] sm:$0xff]
    %v108 = vld [vmem:[#allocation5 + $0xa8] sm:$0xff]
    %v109 = vld [vmem:[#allocation5 + $0xb0] sm:$0xff]
    %v110 = vld [vmem:[#allocation5 + $0xb8] sm:$0xff]
    %v111 = vld [vmem:[#allocation5 + $0xc0] sm:$0xff]
    %v112 = vld [vmem:[#allocation5 + $0xc8] sm:$0xff]
    %v113 = vld [vmem:[#allocation5 + $0xd0] sm:$0xff]
    %v114 = vld [vmem:[#allocation5 + $0xd8] sm:$0xff]
    %v115 = vld [vmem:[#allocation5 + $0xe0] sm:$0xff]
    %v116 = vld [vmem:[#allocation5 + $0xe8] sm:$0xff]
    %v117 = vld [vmem:[#allocation5 + $0xf0] sm:$0xff]
    %v118 = vld [vmem:[#allocation5 + $0xf8] sm:$0xff]
    %v119 = vld [vmem:[#allocation7] sm:$0x3]
    %v121 = vlaneseq
    %v122 = vshrl.u32 %v121, 7
    %v123 = vsub.s32 0, %v122
    %v124 = vrot.slane %v119, %v123
    %v125 = vlaneseq
    %v126 = vshrl.u32 %v125, 7
    %v127 = vsub.s32 1, %v126
    %v128 = vrot.slane %v119, %v127
    %v133 = vunpack.c.l.b16 %v85
    %v134 = vunpack.c.h.b16 %v85
    %v135 = vunpack.c.l.b16 %v86
    %v136 = vunpack.c.h.b16 %v86
    %v137 = vpack.c.b16 %v135, %v133
    %v138 = vpack.c.b16 %v136, %v134
    %v173 = vunpack.c.l.b16 %v87
    %v174 = vunpack.c.h.b16 %v87
    %v175 = vunpack.c.l.b16 %v88
    %v176 = vunpack.c.h.b16 %v88
    %v177 = vunpack.c.l.b16 %v89
    %v178 = vunpack.c.h.b16 %v89
    %v179 = vunpack.c.l.b16 %v90
    %v180 = vunpack.c.h.b16 %v90
    %v181 = vunpack.c.l.b16 %v91
    %v182 = vunpack.c.h.b16 %v91
    %v183 = vunpack.c.l.b16 %v92
    %v184 = vunpack.c.h.b16 %v92
    %v185 = vunpack.c.l.b16 %v93
    %v186 = vunpack.c.h.b16 %v93
    %v187 = vunpack.c.l.b16 %v94
    %v188 = vunpack.c.h.b16 %v94
    %v189 = vunpack.c.l.b16 %v95
    %v190 = vunpack.c.h.b16 %v95
    %v191 = vunpack.c.l.b16 %v96
    %v192 = vunpack.c.h.b16 %v96
    %v193 = vunpack.c.l.b16 %v97
    %v194 = vunpack.c.h.b16 %v97
    %v195 = vunpack.c.l.b16 %v98
    %v196 = vunpack.c.h.b16 %v98
    %v197 = vunpack.c.l.b16 %v99
    %v198 = vunpack.c.h.b16 %v99
    %v199 = vunpack.c.l.b16 %v100
    %v200 = vunpack.c.h.b16 %v100
    %v201 = vunpack.c.l.b16 %v101
    %v202 = vunpack.c.h.b16 %v101
    %v203 = vunpack.c.l.b16 %v102
    %v204 = vunpack.c.h.b16 %v102
    %v205 = vunpack.c.l.b16 %v103
    %v206 = vunpack.c.h.b16 %v103
    %v207 = vunpack.c.l.b16 %v104
    %v208 = vunpack.c.h.b16 %v104
    %v209 = vunpack.c.l.b16 %v105
    %v210 = vunpack.c.h.b16 %v105
    %v211 = vunpack.c.l.b16 %v106
    %v212 = vunpack.c.h.b16 %v106
    %v213 = vunpack.c.l.b16 %v107
    %v214 = vunpack.c.h.b16 %v107
    %v215 = vunpack.c.l.b16 %v108
    %v216 = vunpack.c.h.b16 %v108
    %v217 = vunpack.c.l.b16 %v109
    %v218 = vunpack.c.h.b16 %v109
    %v219 = vunpack.c.l.b16 %v110
    %v220 = vunpack.c.h.b16 %v110
    %v221 = vunpack.c.l.b16 %v111
    %v222 = vunpack.c.h.b16 %v111
    %v223 = vunpack.c.l.b16 %v112
    %v224 = vunpack.c.h.b16 %v112
    %v225 = vunpack.c.l.b16 %v113
    %v226 = vunpack.c.h.b16 %v113
    %v227 = vunpack.c.l.b16 %v114
    %v228 = vunpack.c.h.b16 %v114
    %v229 = vunpack.c.l.b16 %v115
    %v230 = vunpack.c.h.b16 %v115
    %v231 = vunpack.c.l.b16 %v116
    %v232 = vunpack.c.h.b16 %v116
    %v233 = vunpack.c.l.b16 %v117
    %v234 = vunpack.c.h.b16 %v117
    %v235 = vunpack.c.l.b16 %v118
    %v236 = vunpack.c.h.b16 %v118
    %v237 = vpack.c.b16 %v175, %v173
    %v238 = vpack.c.b16 %v176, %v174
    %v239 = vpack.c.b16 %v179, %v177
    %v240 = vpack.c.b16 %v180, %v178
    %v241 = vpack.c.b16 %v183, %v181
    %v242 = vpack.c.b16 %v184, %v182
    %v243 = vpack.c.b16 %v187, %v185
    %v244 = vpack.c.b16 %v188, %v186
    %v245 = vpack.c.b16 %v191, %v189
    %v246 = vpack.c.b16 %v192, %v190
    %v247 = vpack.c.b16 %v195, %v193
    %v248 = vpack.c.b16 %v196, %v194
    %v249 = vpack.c.b16 %v199, %v197
    %v250 = vpack.c.b16 %v200, %v198
    %v251 = vpack.c.b16 %v203, %v201
    %v252 = vpack.c.b16 %v204, %v202
    %v253 = vpack.c.b16 %v207, %v205
    %v254 = vpack.c.b16 %v208, %v206
    %v255 = vpack.c.b16 %v211, %v209
    %v256 = vpack.c.b16 %v212, %v210
    %v257 = vpack.c.b16 %v215, %v213
    %v258 = vpack.c.b16 %v216, %v214
    %v259 = vpack.c.b16 %v219, %v217
    %v260 = vpack.c.b16 %v220, %v218
    %v261 = vpack.c.b16 %v223, %v221
    %v262 = vpack.c.b16 %v224, %v222
    %v263 = vpack.c.b16 %v227, %v225
    %v264 = vpack.c.b16 %v228, %v226
    %v265 = vpack.c.b16 %v231, %v229
    %v266 = vpack.c.b16 %v232, %v230
    %v267 = vpack.c.b16 %v235, %v233
    %v268 = vpack.c.b16 %v236, %v234
    %301 = vmatprep.subr.bf16.mxu0 %v238
    %302 = vmatpush1.bf16.msra.mxu0 %v237
    %303 = vmatprep.subr.bf16.mxu0 %v240
    %304 = vmatpush1.bf16.msra.mxu0 %v239
    %305 = vmatprep.subr.bf16.mxu0 %v242
    %306 = vmatpush1.bf16.msra.mxu0 %v241
    %307 = vmatprep.subr.bf16.mxu0 %v244
    %308 = vmatpush1.bf16.msra.mxu0 %v243
    %309 = vmatprep.subr.bf16.mxu0 %v246
    %310 = vmatpush1.bf16.msra.mxu0 %v245
    %311 = vmatprep.subr.bf16.mxu0 %v248
    %312 = vmatpush1.bf16.msra.mxu0 %v247
    %313 = vmatprep.subr.bf16.mxu0 %v250
    %314 = vmatpush1.bf16.msra.mxu0 %v249
    %315 = vmatprep.subr.bf16.mxu0 %v252
    %316 = vmatpush1.bf16.msra.mxu0 %v251
    %317 = vmatprep.subr.bf16.mxu0 %v254
    %318 = vmatpush1.bf16.msra.mxu0 %v253
    %319 = vmatprep.subr.bf16.mxu0 %v256
    %320 = vmatpush1.bf16.msra.mxu0 %v255
    %321 = vmatprep.subr.bf16.mxu0 %v258
    %322 = vmatpush1.bf16.msra.mxu0 %v257
    %323 = vmatprep.subr.bf16.mxu0 %v260
    %324 = vmatpush1.bf16.msra.mxu0 %v259
    %325 = vmatprep.subr.bf16.mxu0 %v262
    %326 = vmatpush1.bf16.msra.mxu0 %v261
    %327 = vmatprep.subr.bf16.mxu0 %v264
    %328 = vmatpush1.bf16.msra.mxu0 %v263
    %329 = vmatprep.subr.bf16.mxu0 %v266
    %330 = vmatpush1.bf16.msra.mxu0 %v265
    %331 = vmatprep.subr.bf16.mxu0 %v268
    %332 = vmatpush1.bf16.msra.mxu0 %v267
    %333 = vmatprep.mubr.bf16.mxu0 %v138
    %334 = vmatmul.mubr.bf16.gmra.mrb[0].mxu0 %v137
    %v335 = vpop.f32.mrb[0].mxu0
    %v336 = vadd.f32 %v124, %v335
    %v337 = vpop.f32.mrb[0].mxu0
    %v338 = vadd.f32 %v128, %v337
    %v339 = vpop.f32.mrb[0].mxu0
    %v340 = vadd.f32 %v124, %v339
    %v341 = vpop.f32.mrb[0].mxu0
    %v342 = vadd.f32 %v128, %v341
    %343 = vdwg.mxu0
    %v344 = vmax.f32 %v336, 0.0
    %v345 = vmax.f32 %v338, 0.0
    %v346 = vmax.f32 %v340, 0.0
    %v347 = vmax.f32 %v342, 0.0
    %v348 = vpack.c.bf16 %v346, %v344
    %v349 = vpack.c.bf16 %v347, %v345
    %v350 = vld [vmem:[#allocation8] sm:$0xff]
    %v351 = vld [vmem:[#allocation8 + $0x8] sm:$0xff]
    %v352 = vld [vmem:[#allocation8 + $0x10] sm:$0xff]
    %v353 = vld [vmem:[#allocation8 + $0x18] sm:$0xff]
    %v354 = vld [vmem:[#allocation8 + $0x20] sm:$0xff]
    %v355 = vld [vmem:[#allocation8 + $0x28] sm:$0xff]
    %v356 = vld [vmem:[#allocation8 + $0x30] sm:$0xff]
    %v357 = vld [vmem:[#allocation8 + $0x38] sm:$0xff]
    %v358 = vld [vmem:[#allocation8 + $0x40] sm:$0xff]
    %v359 = vld [vmem:[#allocation8 + $0x48] sm:$0xff]
    %v360 = vld [vmem:[#allocation8 + $0x50] sm:$0xff]
    %v361 = vld [vmem:[#allocation8 + $0x58] sm:$0xff]
    %v362 = vld [vmem:[#allocation8 + $0x60] sm:$0xff]
    %v363 = vld [vmem:[#allocation8 + $0x68] sm:$0xff]
    %v364 = vld [vmem:[#allocation8 + $0x70] sm:$0xff]
    %v365 = vld [vmem:[#allocation8 + $0x78] sm:$0xff]
    %v366 = vld [vmem:[#allocation8 + $0x80] sm:$0xff]
    %v367 = vld [vmem:[#allocation8 + $0x88] sm:$0xff]
    %v368 = vld [vmem:[#allocation8 + $0x90] sm:$0xff]
    %v369 = vld [vmem:[#allocation8 + $0x98] sm:$0xff]
    %v370 = vld [vmem:[#allocation8 + $0xa0] sm:$0xff]
    %v371 = vld [vmem:[#allocation8 + $0xa8] sm:$0xff]
    %v372 = vld [vmem:[#allocation8 + $0xb0] sm:$0xff]
    %v373 = vld [vmem:[#allocation8 + $0xb8] sm:$0xff]
    %v374 = vld [vmem:[#allocation8 + $0xc0] sm:$0xff]
    %v375 = vld [vmem:[#allocation8 + $0xc8] sm:$0xff]
    %v376 = vld [vmem:[#allocation8 + $0xd0] sm:$0xff]
    %v377 = vld [vmem:[#allocation8 + $0xd8] sm:$0xff]
    %v378 = vld [vmem:[#allocation8 + $0xe0] sm:$0xff]
    %v379 = vld [vmem:[#allocation8 + $0xe8] sm:$0xff]
    %v380 = vld [vmem:[#allocation8 + $0xf0] sm:$0xff]
    %v381 = vld [vmem:[#allocation8 + $0xf8] sm:$0xff]
    %v382 = vld [vmem:[#allocation10] sm:$0x3]
    %v384 = vlaneseq
    %v385 = vshrl.u32 %v384, 7
    %v386 = vsub.s32 0, %v385
    %v387 = vrot.slane %v382, %v386
    %v388 = vlaneseq
    %v389 = vshrl.u32 %v388, 7
    %v390 = vsub.s32 1, %v389
    %v391 = vrot.slane %v382, %v390
    %v426 = vunpack.c.l.b16 %v350
    %v427 = vunpack.c.h.b16 %v350
    %v428 = vunpack.c.l.b16 %v351
    %v429 = vunpack.c.h.b16 %v351
    %v430 = vunpack.c.l.b16 %v352
    %v431 = vunpack.c.h.b16 %v352
    %v432 = vunpack.c.l.b16 %v353
    %v433 = vunpack.c.h.b16 %v353
    %v434 = vunpack.c.l.b16 %v354
    %v435 = vunpack.c.h.b16 %v354
    %v436 = vunpack.c.l.b16 %v355
    %v437 = vunpack.c.h.b16 %v355
    %v438 = vunpack.c.l.b16 %v356
    %v439 = vunpack.c.h.b16 %v356
    %v440 = vunpack.c.l.b16 %v357
    %v441 = vunpack.c.h.b16 %v357
    %v442 = vunpack.c.l.b16 %v358
    %v443 = vunpack.c.h.b16 %v358
    %v444 = vunpack.c.l.b16 %v359
    %v445 = vunpack.c.h.b16 %v359
    %v446 = vunpack.c.l.b16 %v360
    %v447 = vunpack.c.h.b16 %v360
    %v448 = vunpack.c.l.b16 %v361
    %v449 = vunpack.c.h.b16 %v361
    %v450 = vunpack.c.l.b16 %v362
    %v451 = vunpack.c.h.b16 %v362
    %v452 = vunpack.c.l.b16 %v363
    %v453 = vunpack.c.h.b16 %v363
    %v454 = vunpack.c.l.b16 %v364
    %v455 = vunpack.c.h.b16 %v364
    %v456 = vunpack.c.l.b16 %v365
    %v457 = vunpack.c.h.b16 %v365
    %v458 = vunpack.c.l.b16 %v366
    %v459 = vunpack.c.h.b16 %v366
    %v460 = vunpack.c.l.b16 %v367
    %v461 = vunpack.c.h.b16 %v367
    %v462 = vunpack.c.l.b16 %v368
    %v463 = vunpack.c.h.b16 %v368
    %v464 = vunpack.c.l.b16 %v369
    %v465 = vunpack.c.h.b16 %v369
    %v466 = vunpack.c.l.b16 %v370
    %v467 = vunpack.c.h.b16 %v370
    %v468 = vunpack.c.l.b16 %v371
    %v469 = vunpack.c.h.b16 %v371
    %v470 = vunpack.c.l.b16 %v372
    %v471 = vunpack.c.h.b16 %v372
    %v472 = vunpack.c.l.b16 %v373
    %v473 = vunpack.c.h.b16 %v373
    %v474 = vunpack.c.l.b16 %v374
    %v475 = vunpack.c.h.b16 %v374
    %v476 = vunpack.c.l.b16 %v375
    %v477 = vunpack.c.h.b16 %v375
    %v478 = vunpack.c.l.b16 %v376
    %v479 = vunpack.c.h.b16 %v376
    %v480 = vunpack.c.l.b16 %v377
    %v481 = vunpack.c.h.b16 %v377
    %v482 = vunpack.c.l.b16 %v378
    %v483 = vunpack.c.h.b16 %v378
    %v484 = vunpack.c.l.b16 %v379
    %v485 = vunpack.c.h.b16 %v379
    %v486 = vunpack.c.l.b16 %v380
    %v487 = vunpack.c.h.b16 %v380
    %v488 = vunpack.c.l.b16 %v381
    %v489 = vunpack.c.h.b16 %v381
    %v490 = vpack.c.b16 %v428, %v426
    %v491 = vpack.c.b16 %v429, %v427
    %v492 = vpack.c.b16 %v432, %v430
    %v493 = vpack.c.b16 %v433, %v431
    %v494 = vpack.c.b16 %v436, %v434
    %v495 = vpack.c.b16 %v437, %v435
    %v496 = vpack.c.b16 %v440, %v438
    %v497 = vpack.c.b16 %v441, %v439
    %v498 = vpack.c.b16 %v444, %v442
    %v499 = vpack.c.b16 %v445, %v443
    %v500 = vpack.c.b16 %v448, %v446
    %v501 = vpack.c.b16 %v449, %v447
    %v502 = vpack.c.b16 %v452, %v450
    %v503 = vpack.c.b16 %v453, %v451
    %v504 = vpack.c.b16 %v456, %v454
    %v505 = vpack.c.b16 %v457, %v455
    %v506 = vpack.c.b16 %v460, %v458
    %v507 = vpack.c.b16 %v461, %v459
    %v508 = vpack.c.b16 %v464, %v462
    %v509 = vpack.c.b16 %v465, %v463
    %v510 = vpack.c.b16 %v468, %v466
    %v511 = vpack.c.b16 %v469, %v467
    %v512 = vpack.c.b16 %v472, %v470
    %v513 = vpack.c.b16 %v473, %v471
    %v514 = vpack.c.b16 %v476, %v474
    %v515 = vpack.c.b16 %v477, %v475
    %v516 = vpack.c.b16 %v480, %v478
    %v517 = vpack.c.b16 %v481, %v479
    %v518 = vpack.c.b16 %v484, %v482
    %v519 = vpack.c.b16 %v485, %v483
    %v520 = vpack.c.b16 %v488, %v486
    %v521 = vpack.c.b16 %v489, %v487
    %554 = vmatprep.subr.bf16.mxu0 %v491
    %555 = vmatpush1.bf16.msra.mxu0 %v490
    %556 = vmatprep.subr.bf16.mxu0 %v493
    %557 = vmatpush1.bf16.msra.mxu0 %v492
    %558 = vmatprep.subr.bf16.mxu0 %v495
    %559 = vmatpush1.bf16.msra.mxu0 %v494
    %560 = vmatprep.subr.bf16.mxu0 %v497
    %561 = vmatpush1.bf16.msra.mxu0 %v496
    %562 = vmatprep.subr.bf16.mxu0 %v499
    %563 = vmatpush1.bf16.msra.mxu0 %v498
    %564 = vmatprep.subr.bf16.mxu0 %v501
    %565 = vmatpush1.bf16.msra.mxu0 %v500
    %566 = vmatprep.subr.bf16.mxu0 %v503
    %567 = vmatpush1.bf16.msra.mxu0 %v502
    %568 = vmatprep.subr.bf16.mxu0 %v505
    %569 = vmatpush1.bf16.msra.mxu0 %v504
    %570 = vmatprep.subr.bf16.mxu0 %v507
    %571 = vmatpush1.bf16.msra.mxu0 %v506
    %572 = vmatprep.subr.bf16.mxu0 %v509
    %573 = vmatpush1.bf16.msra.mxu0 %v508
    %574 = vmatprep.subr.bf16.mxu0 %v511
    %575 = vmatpush1.bf16.msra.mxu0 %v510
    %576 = vmatprep.subr.bf16.mxu0 %v513
    %577 = vmatpush1.bf16.msra.mxu0 %v512
    %578 = vmatprep.subr.bf16.mxu0 %v515
    %579 = vmatpush1.bf16.msra.mxu0 %v514
    %580 = vmatprep.subr.bf16.mxu0 %v517
    %581 = vmatpush1.bf16.msra.mxu0 %v516
    %582 = vmatprep.subr.bf16.mxu0 %v519
    %583 = vmatpush1.bf16.msra.mxu0 %v518
    %584 = vmatprep.subr.bf16.mxu0 %v521
    %585 = vmatpush1.bf16.msra.mxu0 %v520
    %586 = vmatprep.mubr.bf16.mxu0 %v349
    %587 = vmatmul.mubr.bf16.gmra.mrb[0].mxu0 %v348
    %v588 = vpop.f32.mrb[0].mxu0
    %v589 = vadd.f32 %v387, %v588
    %v590 = vpop.f32.mrb[0].mxu0
    %v591 = vadd.f32 %v391, %v590
    %v592 = vpop.f32.mrb[0].mxu0
    %v593 = vadd.f32 %v387, %v592
    %v594 = vpop.f32.mrb[0].mxu0
    %v595 = vadd.f32 %v391, %v594
    %596 = vdwg.mxu0
    %597 = vst [vmem:[#allocation11] sm:$0xff] %v589
    %598 = vst [vmem:[#allocation11 + $0x8] sm:$0xff] %v591
    %599 = vst [vmem:[#allocation11 + $0x10] sm:$0xff] %v593
    %600 = vst [vmem:[#allocation11 + $0x18] sm:$0xff] %v595
    // Predicated region
    $region42: #{tpu_custom_call.1} parent=1 // pred_check
      _
    $region43: #{tpu_custom_call.1} parent=1 // pred_check_branch
      %602 = sbr.rel (0) target = $region45
    $region44: #{tpu_custom_call.1} parent=1 // pred_region
      %s604 = ssub.s32 512, 512
      %605 = vsyncadd [#allocation4], %s604
      %s606 = sshll.u32 [#allocation11], 4
      %s607 = int_to_ptr.vmem [resolvable:$true] %s606
      %612 = dma.vmem_to_hbm [thread:$0]  %s607, 512, %s5, [#allocation4], 256, 256, 16
    $region45: #{tpu_custom_call.1} parent=1 // pred_fallthru
      _
    // Predicated region
    $region46: #{tpu_custom_call.1} parent=1 // pred_check
      _
    $region47: #{tpu_custom_call.1} parent=1 // pred_check_branch
      %614 = sbr.rel (0) target = $region49
    $region48: #{tpu_custom_call.1} parent=1 // pred_region
      %615 = dma.done [#allocation4], 512
    $region49: #{tpu_custom_call.1} parent=1 // pred_fallthru
      _
    %616 = vsyncpa [#allocation3], 1
    %617 = vsyncpa [#allocation6], 1
    %618 = vsyncpa [#allocation9], 1
    %619 = vsyncpa [#allocation4], 1

</llo_original>
